<compile_context>
chip_gen: v5e
topology: v5e:2x2
jax: 0.10.0
libtpu: 0.0.40
codegen_flags: <defaults>
</compile_context>

<pallas_src>
import jax
import jax.numpy as jnp
from jax.experimental import pallas as pl
from jax.experimental.pallas import tpu as pltpu

LANE = 128        # TPU lane width
_NEG_BIG = -1e30  # f32-only bias padding -> exp() underflows to exactly 0


def _round_up(n, m):
    return ((n + m - 1) // m) * m


def _mlp_softmax_kernel(x_ref, w1_ref, b1_ref, w2_ref, b2_ref,
                        w3_ref, b3_ref, o_ref):
    x = x_ref[...]                                   # [TB, in_dim]

    # fc1 + relu -> [TB, 128] (f32 MXU accumulation, f32 bias, fused relu)
    h1 = jnp.dot(x, w1_ref[...], preferred_element_type=jnp.float32)
    h1 = jnp.maximum(h1 + b1_ref[...], 0.0)
    h1 = h1.astype(w2_ref.dtype)        # keep native bf16 MXU path (no-op in f32 mode)

    # fc2 + relu -> [TB, 128]
    h2 = jnp.dot(h1, w2_ref[...], preferred_element_type=jnp.float32)
    h2 = jnp.maximum(h2 + b2_ref[...], 0.0)
    h2 = h2.astype(w3_ref.dtype)

    # fc3 -> [TB, 128] logits; padded columns carry a -1e30 f32 bias so they
    # contribute exactly 0 to the softmax.  Softmax runs on the full 128-lane
    # vreg (hardware minimum width) — no lane-slicing layout churn here.
    logits = jnp.dot(h2, w3_ref[...], preferred_element_type=jnp.float32)
    logits = logits + b3_ref[...]

    m = jnp.max(logits, axis=-1, keepdims=True)
    e = jnp.exp(logits - m)
    denom = jnp.sum(e, axis=-1, keepdims=True)
    inv = pl.reciprocal(denom, approx=True)          # EUP slot
    inv = inv * (2.0 - denom * inv)                  # one Newton step -> ~exact f32
    probs = e * inv

    # Narrow store: only the real out_dim columns go back to HBM (masked vst
    # in VMEM is accepted in exchange for ~32x less output write traffic).
    out_dim = o_ref.shape[-1]
    o_ref[...] = probs[:, :out_dim].astype(o_ref.dtype)


def pack_params(params, compute_dtype=jnp.bfloat16):
    """Pad logical params (PyTorch-shaped, transposed) to lane-dense layout.

    Input:  w1 [in,10], b1 [1,10], w2 [10,4], b2 [1,4], w3 [4,out], b3 [1,out]
    Output: w1 [in,128], b1 [1,128], w2 [128,128], b2 [1,128],
            w3 [128,128], b3 [1,128]   (hidden/out dims rounded up to 128).

    Weights are cast to `compute_dtype` (bf16 by default -> native MXU rate,
    halved HBM/VMEM footprint).  Biases stay float32 so the -1e30 padding in
    b3 is dtype-safe and the bias add happens on the f32 accumulator.
    """
    w1, b1 = params["w1"], params["b1"]
    w2, b2 = params["w2"], params["b2"]
    w3, b3 = params["w3"], params["b3"]
    h1p = _round_up(w1.shape[1], LANE)     # 10  -> 128
    h2p = _round_up(w2.shape[1], LANE)     # 4   -> 128
    outp = _round_up(w3.shape[1], LANE)    # out -> 128

    w1p = jnp.pad(w1, ((0, 0), (0, h1p - w1.shape[1]))).astype(compute_dtype)
    b1p = jnp.pad(b1, ((0, 0), (0, h1p - b1.shape[1]))).astype(jnp.float32)
    w2p = jnp.pad(w2, ((0, h1p - w2.shape[0]), (0, h2p - w2.shape[1]))).astype(compute_dtype)
    b2p = jnp.pad(b2, ((0, 0), (0, h2p - b2.shape[1]))).astype(jnp.float32)
    w3p = jnp.pad(w3, ((0, h2p - w3.shape[0]), (0, outp - w3.shape[1]))).astype(compute_dtype)
    b3p = jnp.pad(b3, ((0, 0), (0, outp - b3.shape[1])),
                  constant_values=_NEG_BIG).astype(jnp.float32)
    return (w1p, b1p, w2p, b2p, w3p, b3p)


def groupnet4qa_forward(x, packed_params, out_dim, *, block_rows=4096):
    """x: [B, input_dim]. packed_params: from pack_params().

    Returns [B, out_dim] float32 softmax probabilities.
    """
    w1, b1, w2, b2, w3, b3 = packed_params
    x = x.astype(w1.dtype)        # match weight dtype so the dots stay on the bf16 MXU path
    B, in_dim = x.shape

    # Batch tile: 4096 rows amortizes the ~0.35 µs/step overhead while the
    # working set (~9 MiB: four [TB,128] f32 intermediates + double-buffered
    # x/out tiles) fits the 16 MiB default scoped VMEM on v5e and the 32 MiB
    # default on v6e/v7x.  For large B keep >=2 tiles so v7x's 2 TensorCores
    # both get work via the "parallel" grid axis.
    tb = min(block_rows, B)
    if B >= 1024:
        tb = min(tb, _round_up(pl.cdiv(B, 2), 8))
    grid = (pl.cdiv(B, tb),)

    def resident_spec(shape):  # weights/biases: same block every grid step
        return pl.BlockSpec(shape, lambda i: (0,) * len(shape))

    return pl.pallas_call(
        _mlp_softmax_kernel,
        out_shape=jax.ShapeDtypeStruct((B, out_dim), jnp.float32),
        grid=grid,
        in_specs=[
            pl.BlockSpec((tb, in_dim), lambda i: (i, 0)),
            resident_spec(w1.shape), resident_spec(b1.shape),
            resident_spec(w2.shape), resident_spec(b2.shape),
            resident_spec(w3.shape), resident_spec(b3.shape),
        ],
        out_specs=pl.BlockSpec((tb, out_dim), lambda i: (i, 0)),
        compiler_params=pltpu.CompilerParams(
            dimension_semantics=("parallel",)),  # v7x: split tiles over 2 TCs
    )(x, w1, b1, w2, b2, w3, b3)


def init_params(key, input_dim, output_dim):
    """Deterministic init matching PyTorch Linear shapes.

    PyTorch Linear(in, out) has weight [out, in], bias [out]; we store the
    transposed weight [in, out] and bias as [1, out] (logical, unpadded).
    """
    dims = [(input_dim, 10), (10, 4), (4, output_dim)]
    params = {}
    for i, (fan_in, fan_out) in enumerate(dims, start=1):
        key, kw, kb = jax.random.split(key, 3)
        bound = 1.0 / (fan_in ** 0.5)
        params[f"w{i}"] = jax.random.uniform(
            kw, (fan_in, fan_out), jnp.float32, -bound, bound)
        params[f"b{i}"] = jax.random.uniform(
            kb, (1, fan_out), jnp.float32, -bound, bound)
    return params


def reference_forward(x, params):
    h1 = jnp.maximum(x @ params["w1"] + params["b1"], 0.0)
    h2 = jnp.maximum(h1 @ params["w2"] + params["b2"], 0.0)
    logits = h2 @ params["w3"] + params["b3"]
    return jax.nn.softmax(logits, axis=1)


if __name__ == "__main__":
    key = jax.random.PRNGKey(0)
    batch, input_dim, output_dim = 8, 32, 4

    key, kx = jax.random.split(key)
    x = jax.random.normal(kx, (batch, input_dim), jnp.float32)
    params = init_params(key, input_dim, output_dim)
    ref = reference_forward(x, params)

    # 1) f32 compute path: exact check against the f32 reference.
    packed_f32 = pack_params(params, compute_dtype=jnp.float32)
    out_f32 = jax.block_until_ready(groupnet4qa_forward(x, packed_f32, output_dim))
    assert out_f32.shape == (batch, output_dim)
    assert jnp.allclose(out_f32, ref, atol=1e-5, rtol=1e-5), \
        f"f32 max abs err {float(jnp.max(jnp.abs(out_f32 - ref)))}"
    assert jnp.allclose(jnp.sum(out_f32, axis=1), jnp.ones((batch,)), atol=1e-5)

    # 2) bf16 production path (default): weights + x in bf16, f32 accumulation.
    packed_bf16 = pack_params(params)  # bf16 weights
    out_bf16 = jax.block_until_ready(groupnet4qa_forward(x, packed_bf16, output_dim))
    assert out_bf16.shape == (batch, output_dim)
    assert jnp.allclose(out_bf16, ref, atol=2e-2), \
        f"bf16 max abs err {float(jnp.max(jnp.abs(out_bf16 - ref)))}"
    assert jnp.allclose(jnp.sum(out_bf16, axis=1), jnp.ones((batch,)), atol=1e-4)

    print("KERNEL_OK")
</pallas_src>

<mosaic_0001>
module attributes {stable_mosaic.version = 11 : i64} {
  func.func @_mlp_softmax_kernel(%arg0: i32, %arg1: memref<8x32xf32, #tpu.memory_space<vmem>>, %arg2: memref<32x128xf32, #tpu.memory_space<vmem>>, %arg3: memref<1x128xf32, #tpu.memory_space<vmem>>, %arg4: memref<128x128xf32, #tpu.memory_space<vmem>>, %arg5: memref<1x128xf32, #tpu.memory_space<vmem>>, %arg6: memref<128x128xf32, #tpu.memory_space<vmem>>, %arg7: memref<1x128xf32, #tpu.memory_space<vmem>>, %arg8: memref<8x4xf32, #tpu.memory_space<vmem>>) attributes {dimension_semantics = [#tpu.dimension_semantics<parallel>], iteration_bounds = array<i64: 1>, scalar_prefetch = 0 : i64, scratch_operands = 0 : i64, tpu.core_type = #tpu.core_type<tc>, window_params = [{transform_indices = @transform_0, window_bounds = array<i64: 8, 32>}, {pipeline_mode = #tpu.pipeline_mode<synchronous>, transform_indices = @transform_1, window_bounds = array<i64: 32, 128>}, {pipeline_mode = #tpu.pipeline_mode<synchronous>, transform_indices = @transform_2, window_bounds = array<i64: 1, 128>}, {pipeline_mode = #tpu.pipeline_mode<synchronous>, transform_indices = @transform_3, window_bounds = array<i64: 128, 128>}, {pipeline_mode = #tpu.pipeline_mode<synchronous>, transform_indices = @transform_4, window_bounds = array<i64: 1, 128>}, {pipeline_mode = #tpu.pipeline_mode<synchronous>, transform_indices = @transform_5, window_bounds = array<i64: 128, 128>}, {pipeline_mode = #tpu.pipeline_mode<synchronous>, transform_indices = @transform_6, window_bounds = array<i64: 1, 128>}, {transform_indices = @transform_7, window_bounds = array<i64: 8, 4>}]} {
    %c0 = arith.constant 0 : index
    %c0_0 = arith.constant 0 : index
    %0 = vector.load %arg1[%c0, %c0_0] : memref<8x32xf32, #tpu.memory_space<vmem>>, vector<8x32xf32>
    %c0_1 = arith.constant 0 : index
    %c0_2 = arith.constant 0 : index
    %1 = vector.load %arg2[%c0_1, %c0_2] : memref<32x128xf32, #tpu.memory_space<vmem>>, vector<32x128xf32>
    %cst = arith.constant dense<0.000000e+00> : vector<8x128xf32>
    %2 = tpu.matmul %0, %1, %cst {dimension_numbers = #tpu.dot_dimension_numbers<[1], [0], [0], [1], [0, 0, 1, 1], [], []>} : vector<8x32xf32>, vector<32x128xf32>, vector<8x128xf32> -> vector<8x128xf32>
    %c0_3 = arith.constant 0 : index
    %c0_4 = arith.constant 0 : index
    %3 = vector.load %arg3[%c0_3, %c0_4] : memref<1x128xf32, #tpu.memory_space<vmem>>, vector<1x128xf32>
    %4 = vector.broadcast %3 : vector<1x128xf32> to vector<8x128xf32>
    %5 = arith.addf %2, %4 : vector<8x128xf32>
    %cst_5 = arith.constant 0.000000e+00 : f32
    %6 = vector.broadcast %cst_5 : f32 to vector<8x128xf32>
    %7 = arith.maximumf %5, %6 : vector<8x128xf32>
    %c0_6 = arith.constant 0 : index
    %c0_7 = arith.constant 0 : index
    %8 = vector.load %arg4[%c0_6, %c0_7] : memref<128x128xf32, #tpu.memory_space<vmem>>, vector<128x128xf32>
    %cst_8 = arith.constant dense<0.000000e+00> : vector<8x128xf32>
    %9 = tpu.matmul %7, %8, %cst_8 {dimension_numbers = #tpu.dot_dimension_numbers<[1], [0], [0], [1], [0, 0, 1, 1], [], []>} : vector<8x128xf32>, vector<128x128xf32>, vector<8x128xf32> -> vector<8x128xf32>
    %c0_9 = arith.constant 0 : index
    %c0_10 = arith.constant 0 : index
    %10 = vector.load %arg5[%c0_9, %c0_10] : memref<1x128xf32, #tpu.memory_space<vmem>>, vector<1x128xf32>
    %11 = vector.broadcast %10 : vector<1x128xf32> to vector<8x128xf32>
    %12 = arith.addf %9, %11 : vector<8x128xf32>
    %cst_11 = arith.constant 0.000000e+00 : f32
    %13 = vector.broadcast %cst_11 : f32 to vector<8x128xf32>
    %14 = arith.maximumf %12, %13 : vector<8x128xf32>
    %c0_12 = arith.constant 0 : index
    %c0_13 = arith.constant 0 : index
    %15 = vector.load %arg6[%c0_12, %c0_13] : memref<128x128xf32, #tpu.memory_space<vmem>>, vector<128x128xf32>
    %cst_14 = arith.constant dense<0.000000e+00> : vector<8x128xf32>
    %16 = tpu.matmul %14, %15, %cst_14 {dimension_numbers = #tpu.dot_dimension_numbers<[1], [0], [0], [1], [0, 0, 1, 1], [], []>} : vector<8x128xf32>, vector<128x128xf32>, vector<8x128xf32> -> vector<8x128xf32>
    %c0_15 = arith.constant 0 : index
    %c0_16 = arith.constant 0 : index
    %17 = vector.load %arg7[%c0_15, %c0_16] : memref<1x128xf32, #tpu.memory_space<vmem>>, vector<1x128xf32>
    %18 = vector.broadcast %17 : vector<1x128xf32> to vector<8x128xf32>
    %19 = arith.addf %16, %18 : vector<8x128xf32>
    %cst_17 = arith.constant dense<0xFF800000> : vector<8xf32>
    %20 = vector.multi_reduction <maximumf>, %19, %cst_17 [1] : vector<8x128xf32> to vector<8xf32>
    %21 = vector.shape_cast %20 : vector<8xf32> to vector<8x1xf32>
    %22 = vector.broadcast %21 : vector<8x1xf32> to vector<8x128xf32>
    %23 = arith.subf %19, %22 : vector<8x128xf32>
    %24 = math.exp %23 : vector<8x128xf32>
    %cst_18 = arith.constant dense<0.000000e+00> : vector<8xf32>
    %25 = vector.multi_reduction <add>, %24, %cst_18 [1] : vector<8x128xf32> to vector<8xf32>
    %26 = vector.shape_cast %25 : vector<8xf32> to vector<8x1xf32>
    %27 = tpu.reciprocal %26 {approx = true} : vector<8x1xf32> -> vector<8x1xf32>
    %28 = arith.mulf %26, %27 : vector<8x1xf32>
    %cst_19 = arith.constant 2.000000e+00 : f32
    %29 = vector.broadcast %cst_19 : f32 to vector<8x1xf32>
    %30 = arith.subf %29, %28 : vector<8x1xf32>
    %31 = arith.mulf %27, %30 : vector<8x1xf32>
    %32 = vector.broadcast %31 : vector<8x1xf32> to vector<8x128xf32>
    %33 = arith.mulf %24, %32 : vector<8x128xf32>
    %34 = vector.extract_strided_slice %33 {offsets = [0, 0], sizes = [8, 4], strides = [1, 1]} : vector<8x128xf32> to vector<8x4xf32>
    %c0_20 = arith.constant 0 : index
    %c0_21 = arith.constant 0 : index
    %35 = vector.load %arg8[%c0_20, %c0_21] : memref<8x4xf32, #tpu.memory_space<vmem>>, vector<8x4xf32>
    tpu.vector_store %arg8[%c0_20, %c0_21], %34 {strides = array<i32>} : memref<8x4xf32, #tpu.memory_space<vmem>>, vector<8x4xf32>,
    return
  }
  func.func @transform_0(%arg0: i32) -> (i32, i32) {
    %c0_i32 = arith.constant 0 : i32
    %c0_i32_0 = arith.constant 0 : i32
    return %arg0, %c0_i32 : i32, i32
  }
  func.func @transform_1(%arg0: i32) -> (i32, i32) {
    %c0_i32 = arith.constant 0 : i32
    %c0_i32_0 = arith.constant 0 : i32
    %c0_i32_1 = arith.constant 0 : i32
    return %c0_i32, %c0_i32_0 : i32, i32
  }
  func.func @transform_2(%arg0: i32) -> (i32, i32) {
    %c0_i32 = arith.constant 0 : i32
    %c0_i32_0 = arith.constant 0 : i32
    %c0_i32_1 = arith.constant 0 : i32
    return %c0_i32, %c0_i32_0 : i32, i32
  }
  func.func @transform_3(%arg0: i32) -> (i32, i32) {
    %c0_i32 = arith.constant 0 : i32
    %c0_i32_0 = arith.constant 0 : i32
    %c0_i32_1 = arith.constant 0 : i32
    return %c0_i32, %c0_i32_0 : i32, i32
  }
  func.func @transform_4(%arg0: i32) -> (i32, i32) {
    %c0_i32 = arith.constant 0 : i32
    %c0_i32_0 = arith.constant 0 : i32
    %c0_i32_1 = arith.constant 0 : i32
    return %c0_i32, %c0_i32_0 : i32, i32
  }
  func.func @transform_5(%arg0: i32) -> (i32, i32) {
    %c0_i32 = arith.constant 0 : i32
    %c0_i32_0 = arith.constant 0 : i32
    %c0_i32_1 = arith.constant 0 : i32
    return %c0_i32, %c0_i32_0 : i32, i32
  }
  func.func @transform_6(%arg0: i32) -> (i32, i32) {
    %c0_i32 = arith.constant 0 : i32
    %c0_i32_0 = arith.constant 0 : i32
    %c0_i32_1 = arith.constant 0 : i32
    return %c0_i32, %c0_i32_0 : i32, i32
  }
  func.func @transform_7(%arg0: i32) -> (i32, i32) {
    %c0_i32 = arith.constant 0 : i32
    %c0_i32_0 = arith.constant 0 : i32
    return %arg0, %c0_i32 : i32, i32
  }
}

</mosaic_0001>

<llo_original>
// kernel: tpu_custom_call.1
$region0: #{tpu_custom_call.1}
  #allocation0 [shape = 'u32[]', space=smem, size = 0x4, offset = 0x4, fixed_abs, tag = 'smem constant byte address 0x4 - core index']
  #allocation1 [shape = 'u32[72,128]{1,0:T(1,128)}', space=vmem, size = 0x9000, scoped, tag = 'internal scratch']
  %s0 = inlined_call_operand.hbm [shape: f32[8,32], index: 0, kind: input, shape index: {}]
  %s1 = inlined_call_operand.hbm [shape: f32[32,128], index: 1, kind: input, shape index: {}]
  %s2 = inlined_call_operand.vmem [shape: f32[1,128], index: 2, kind: input, shape index: {}]
  %s3 = inlined_call_operand.hbm [shape: f32[128,128], index: 3, kind: input, shape index: {}]
  %s4 = inlined_call_operand.vmem [shape: f32[1,128], index: 4, kind: input, shape index: {}]
  %s5 = inlined_call_operand.hbm [shape: f32[128,128], index: 5, kind: input, shape index: {}]
  %s6 = inlined_call_operand.vmem [shape: f32[1,128], index: 6, kind: input, shape index: {}]
  %s7 = inlined_call_operand.vmem [shape: f32[8,4], index: 7, kind: output, shape index: {}]
  %s8 = sld [smem:[#allocation0]]
  $region54: #{tpu_custom_call.1} parent=0
    _
  %s10 = ssub.s32 1, %s8
  %s11 = scalar_select 0, %s10, %s8
  $region1: #{tpu_custom_call.1} parent=0
    #allocation2 [shape = 'u8[4096]{0}', space=vmem, size = 0x1000, scoped, tag = 'input window, operand 0, single buffered']
    #allocation3 [shape = 's32[1]{0}', space=sflag, size = 0x4, scoped, tag = 'scoped memory for tpu_custom_call.1']
    #allocation4 [shape = 'u8[16384]{0}', space=vmem, size = 0x4000, scoped, tag = 'input window, operand 1, single buffered']
    #allocation5 [shape = 's32[1]{0}', space=sflag, size = 0x4, scoped, tag = 'scoped memory for tpu_custom_call.1']
    #allocation6 [shape = 'u8[65536]{0}', space=vmem, size = 0x10000, scoped, tag = 'input window, operand 3, single buffered']
    #allocation7 [shape = 'u8[65536]{0}', space=vmem, size = 0x10000, scoped, tag = 'input window, operand 5, single buffered']
    #allocation8 [shape = 's32[1]{0}', space=sflag, size = 0x4, scoped, tag = 'scoped memory for tpu_custom_call.1']
    %12 = vsyncpa [#allocation3], 0
    %13 = vsyncpa [#allocation5], 0
    %14 = vsyncpa [#allocation8], 0
    // Predicated region
    $region2: #{tpu_custom_call.1} parent=1 // pred_check
      _
    $region3: #{tpu_custom_call.1} parent=1 // pred_check_branch
      %16 = sbr.rel (0) target = $region5
    $region4: #{tpu_custom_call.1} parent=1 // pred_region
      %18 = vsyncadd [#allocation3], 0
      %s20 = sshll.u32 %s0, 4
      %s21 = int_to_ptr.hbm [resolvable:$true] %s20
      %s22 = sshll.u32 [#allocation2], 4
      %s23 = int_to_ptr.vmem [resolvable:$true] %s22
      %25 = dma.hbm_to_vmem [thread:$0]  %s21, 128, %s23, [#allocation3]
    $region5: #{tpu_custom_call.1} parent=1 // pred_fallthru
      _
    // Predicated region
    $region6: #{tpu_custom_call.1} parent=1 // pred_check
      _
    $region7: #{tpu_custom_call.1} parent=1 // pred_check_branch
      %27 = sbr.rel (0) target = $region9
    $region8: #{tpu_custom_call.1} parent=1 // pred_region
      %29 = vsyncadd [#allocation5], 0
      %s30 = sshll.u32 %s1, 4
      %s31 = int_to_ptr.hbm [resolvable:$true] %s30
      %s32 = sshll.u32 [#allocation4], 4
      %s33 = int_to_ptr.vmem [resolvable:$true] %s32
      %38 = dma.hbm_to_vmem [thread:$0]  %s31, 512, %s33, [#allocation5], 128, 128, 8
    $region9: #{tpu_custom_call.1} parent=1 // pred_fallthru
      _
    // Predicated region
    $region10: #{tpu_custom_call.1} parent=1 // pred_check
      _
    $region11: #{tpu_custom_call.1} parent=1 // pred_check_branch
      %40 = sbr.rel (0) target = $region13
    $region12: #{tpu_custom_call.1} parent=1 // pred_region
      _
    $region13: #{tpu_custom_call.1} parent=1 // pred_fallthru
      _
    // Predicated region
    $region14: #{tpu_custom_call.1} parent=1 // pred_check
      _
    $region15: #{tpu_custom_call.1} parent=1 // pred_check_branch
      %42 = sbr.rel (0) target = $region17
    $region16: #{tpu_custom_call.1} parent=1 // pred_region
      %44 = vsyncadd [#allocation5], 0
      %s45 = sshll.u32 %s3, 4
      %s46 = int_to_ptr.hbm [resolvable:$true] %s45
      %s47 = sshll.u32 [#allocation6], 4
      %s48 = int_to_ptr.vmem [resolvable:$true] %s47
      %53 = dma.hbm_to_vmem [thread:$0]  %s46, 2048, %s48, [#allocation5], 128, 128, 8
    $region17: #{tpu_custom_call.1} parent=1 // pred_fallthru
      _
    // Predicated region
    $region18: #{tpu_custom_call.1} parent=1 // pred_check
      _
    $region19: #{tpu_custom_call.1} parent=1 // pred_check_branch
      %55 = sbr.rel (0) target = $region21
    $region20: #{tpu_custom_call.1} parent=1 // pred_region
      _
    $region21: #{tpu_custom_call.1} parent=1 // pred_fallthru
      _
    // Predicated region
    $region22: #{tpu_custom_call.1} parent=1 // pred_check
      _
    $region23: #{tpu_custom_call.1} parent=1 // pred_check_branch
      %57 = sbr.rel (0) target = $region25
    $region24: #{tpu_custom_call.1} parent=1 // pred_region
      %59 = vsyncadd [#allocation8], 0
      %s60 = sshll.u32 %s5, 4
      %s61 = int_to_ptr.hbm [resolvable:$true] %s60
      %s62 = sshll.u32 [#allocation7], 4
      %s63 = int_to_ptr.vmem [resolvable:$true] %s62
      %68 = dma.hbm_to_vmem [thread:$0]  %s61, 2048, %s63, [#allocation8], 128, 128, 8
    $region25: #{tpu_custom_call.1} parent=1 // pred_fallthru
      _
    // Predicated region
    $region26: #{tpu_custom_call.1} parent=1 // pred_check
      _
    $region27: #{tpu_custom_call.1} parent=1 // pred_check_branch
      %70 = sbr.rel (0) target = $region29
    $region28: #{tpu_custom_call.1} parent=1 // pred_region
      _
    $region29: #{tpu_custom_call.1} parent=1 // pred_fallthru
      _
    // Predicated region
    $region30: #{tpu_custom_call.1} parent=1 // pred_check
      _
    $region31: #{tpu_custom_call.1} parent=1 // pred_check_branch
      %72 = sbr.rel (0) target = $region33
    $region32: #{tpu_custom_call.1} parent=1 // pred_region
      %74 = dma.done [#allocation3], 128
    $region33: #{tpu_custom_call.1} parent=1 // pred_fallthru
      _
    // Predicated region
    $region34: #{tpu_custom_call.1} parent=1 // pred_check
      _
    $region35: #{tpu_custom_call.1} parent=1 // pred_check_branch
      %76 = sbr.rel (0) target = $region37
    $region36: #{tpu_custom_call.1} parent=1 // pred_region
      %78 = dma.done [#allocation5], 512
    $region37: #{tpu_custom_call.1} parent=1 // pred_fallthru
      _
    // Predicated region
    $region38: #{tpu_custom_call.1} parent=1 // pred_check
      _
    $region39: #{tpu_custom_call.1} parent=1 // pred_check_branch
      %80 = sbr.rel (0) target = $region41
    $region40: #{tpu_custom_call.1} parent=1 // pred_region
      %82 = dma.done [#allocation5], 2048
    $region41: #{tpu_custom_call.1} parent=1 // pred_fallthru
      _
    // Predicated region
    $region42: #{tpu_custom_call.1} parent=1 // pred_check
      _
    $region43: #{tpu_custom_call.1} parent=1 // pred_check_branch
      %84 = sbr.rel (0) target = $region45
    $region44: #{tpu_custom_call.1} parent=1 // pred_region
      %86 = dma.done [#allocation8], 2048
    $region45: #{tpu_custom_call.1} parent=1 // pred_fallthru
      _
    %v87 = vld [vmem:[#allocation2] sm:$0xff]
    %v88 = vld [vmem:[#allocation4] sm:$0xff]
    %v89 = vld [vmem:[#allocation4 + $0x8] sm:$0xff]
    %v90 = vld [vmem:[#allocation4 + $0x10] sm:$0xff]
    %v91 = vld [vmem:[#allocation4 + $0x18] sm:$0xff]
    %v92 = vld [vmem:[%s2] sm:$0x1]
    %v94 = vperm.slane %v92, 0
    %vm96 = vcmask 261120
    %v98 = vsel %vm96, %v87, 0
    %100 = vmatpush.msra.mxu0 0.0
    %101 = vmatpush.msra.mxu0 0.0
    %102 = vmatpush.msra.mxu0 0.0
    %103 = vmatpush.msra.mxu0 0.0
    %104 = vmatpush.msra.mxu0 0.0
    %105 = vmatpush.msra.mxu0 0.0
    %106 = vmatpush.msra.mxu0 0.0
    %107 = vmatpush.msra.mxu0 0.0
    %108 = vmatpush.msra.mxu0 0.0
    %109 = vmatpush.msra.mxu0 0.0
    %110 = vmatpush.msra.mxu0 0.0
    %111 = vmatpush.msra.mxu0 0.0
    %112 = vmatpush.msra.mxu0 %v91
    %113 = vmatpush.msra.mxu0 %v90
    %114 = vmatpush.msra.mxu0 %v89
    %115 = vmatpush.msra.mxu0 %v88
    %116 = vmatmul.f32.gmra.mxu0 %v98
    %v117 = vpop.f32.mrf.mxu0
    %v118 = vadd.f32 %v94, %v117
    %119 = vdwg.mxu0
    %v120 = vmax.f32 %v118, 0.0
    %v121 = vld [vmem:[#allocation6] sm:$0xff]
    %v122 = vld [vmem:[#allocation6 + $0x8] sm:$0xff]
    %v123 = vld [vmem:[#allocation6 + $0x10] sm:$0xff]
    %v124 = vld [vmem:[#allocation6 + $0x18] sm:$0xff]
    %v125 = vld [vmem:[#allocation6 + $0x20] sm:$0xff]
    %v126 = vld [vmem:[#allocation6 + $0x28] sm:$0xff]
    %v127 = vld [vmem:[#allocation6 + $0x30] sm:$0xff]
    %v128 = vld [vmem:[#allocation6 + $0x38] sm:$0xff]
    %v129 = vld [vmem:[#allocation6 + $0x40] sm:$0xff]
    %v130 = vld [vmem:[#allocation6 + $0x48] sm:$0xff]
    %v131 = vld [vmem:[#allocation6 + $0x50] sm:$0xff]
    %v132 = vld [vmem:[#allocation6 + $0x58] sm:$0xff]
    %v133 = vld [vmem:[#allocation6 + $0x60] sm:$0xff]
    %v134 = vld [vmem:[#allocation6 + $0x68] sm:$0xff]
    %v135 = vld [vmem:[#allocation6 + $0x70] sm:$0xff]
    %v136 = vld [vmem:[#allocation6 + $0x78] sm:$0xff]
    %v137 = vld [vmem:[%s4] sm:$0x1]
    %v139 = vperm.slane %v137, 0
    %141 = vmatpush.msra.mxu0 %v136
    %142 = vmatpush.msra.mxu0 %v135
    %143 = vmatpush.msra.mxu0 %v134
    %144 = vmatpush.msra.mxu0 %v133
    %145 = vmatpush.msra.mxu0 %v132
    %146 = vmatpush.msra.mxu0 %v131
    %147 = vmatpush.msra.mxu0 %v130
    %148 = vmatpush.msra.mxu0 %v129
    %149 = vmatpush.msra.mxu0 %v128
    %150 = vmatpush.msra.mxu0 %v127
    %151 = vmatpush.msra.mxu0 %v126
    %152 = vmatpush.msra.mxu0 %v125
    %153 = vmatpush.msra.mxu0 %v124
    %154 = vmatpush.msra.mxu0 %v123
    %155 = vmatpush.msra.mxu0 %v122
    %156 = vmatpush.msra.mxu0 %v121
    %157 = vmatmul.f32.gmra.mxu0 %v120
    %v158 = vpop.f32.mrf.mxu0
    %v159 = vadd.f32 %v139, %v158
    %160 = vdwg.mxu0
    %v161 = vmax.f32 %v159, 0.0
    %v162 = vld [vmem:[#allocation7] sm:$0xff]
    %v163 = vld [vmem:[#allocation7 + $0x8] sm:$0xff]
    %v164 = vld [vmem:[#allocation7 + $0x10] sm:$0xff]
    %v165 = vld [vmem:[#allocation7 + $0x18] sm:$0xff]
    %v166 = vld [vmem:[#allocation7 + $0x20] sm:$0xff]
    %v167 = vld [vmem:[#allocation7 + $0x28] sm:$0xff]
    %v168 = vld [vmem:[#allocation7 + $0x30] sm:$0xff]
    %v169 = vld [vmem:[#allocation7 + $0x38] sm:$0xff]
    %v170 = vld [vmem:[#allocation7 + $0x40] sm:$0xff]
    %v171 = vld [vmem:[#allocation7 + $0x48] sm:$0xff]
    %v172 = vld [vmem:[#allocation7 + $0x50] sm:$0xff]
    %v173 = vld [vmem:[#allocation7 + $0x58] sm:$0xff]
    %v174 = vld [vmem:[#allocation7 + $0x60] sm:$0xff]
    %v175 = vld [vmem:[#allocation7 + $0x68] sm:$0xff]
    %v176 = vld [vmem:[#allocation7 + $0x70] sm:$0xff]
    %v177 = vld [vmem:[#allocation7 + $0x78] sm:$0xff]
    %v178 = vld [vmem:[%s6] sm:$0x1]
    %v180 = vperm.slane %v178, 0
    %182 = vmatpush.msra.mxu0 %v177
    %183 = vmatpush.msra.mxu0 %v176
    %184 = vmatpush.msra.mxu0 %v175
    %185 = vmatpush.msra.mxu0 %v174
    %186 = vmatpush.msra.mxu0 %v173
    %187 = vmatpush.msra.mxu0 %v172
    %188 = vmatpush.msra.mxu0 %v171
    %189 = vmatpush.msra.mxu0 %v170
    %190 = vmatpush.msra.mxu0 %v169
    %191 = vmatpush.msra.mxu0 %v168
    %192 = vmatpush.msra.mxu0 %v167
    %193 = vmatpush.msra.mxu0 %v166
    %194 = vmatpush.msra.mxu0 %v165
    %195 = vmatpush.msra.mxu0 %v164
    %196 = vmatpush.msra.mxu0 %v163
    %197 = vmatpush.msra.mxu0 %v162
    %198 = vmatmul.f32.gmra.mxu0 %v161
    %v199 = vpop.f32.mrf.mxu0
    %v200 = vadd.f32 %v180, %v199
    %201 = vdwg.mxu0
    %202 = vmax.xlane.f32.xlu0 %v200
    %v203 = vpop.xlane.xlu0 %202
    %v204 = vsub.f32 %v200, %v203
    %v205 = vmul.f32 %v204, 1.442695
    %v206 = vpow.pop %v205
    %207 = vadd.xlane.f32.xlu0 %v206
    %v208 = vpop.xlane.xlu0 %207
    %v209 = vrcp.pop %v208
    %v210 = vmul.f32 %v208, %v209
    %v211 = vsub.f32 2.0, %v210
    %v212 = vmul.f32 %v209, %v211
    %v213 = vmul.f32 %v206, %v212
    %vm214 = vcmask 31744
    %215 = vst.msk [vmem:[%s7] sm:$0xff] %vm214, %v213
    // Predicated region
    $region46: #{tpu_custom_call.1} parent=1 // pred_check
      _
    $region47: #{tpu_custom_call.1} parent=1 // pred_check_branch
      %217 = sbr.rel (0) target = $region49
    $region48: #{tpu_custom_call.1} parent=1 // pred_region
      _
    $region49: #{tpu_custom_call.1} parent=1 // pred_fallthru
      _
    // Predicated region
    $region50: #{tpu_custom_call.1} parent=1 // pred_check
      _
    $region51: #{tpu_custom_call.1} parent=1 // pred_check_branch
      %219 = sbr.rel (0) target = $region53
    $region52: #{tpu_custom_call.1} parent=1 // pred_region
      _
    $region53: #{tpu_custom_call.1} parent=1 // pred_fallthru
      _
    %220 = vsyncpa [#allocation3], 1
    %221 = vsyncpa [#allocation5], 1
    %222 = vsyncpa [#allocation8], 1

</llo_original>
